<compile_context>
chip_gen: v7x
topology: tpu7x:2x2x1
jax: 0.10.0
libtpu: 0.0.40
codegen_flags: <defaults>
</compile_context>

<pallas_src>
import jax
import jax.numpy as jnp
from jax.experimental import pallas as pl
from jax.experimental.pallas import tpu as pltpu

OBS_DIM = 48
ACTION_DIM = 12
HIDDEN_DIM = 256
OUT_PAD = 128                 # lane-dense output stores (12 -> 128 padded cols)
DEFAULT_BATCH_TILE = 2048     # per review: 1024-2048 rows per grid step


def _round_up(x, m):
    return ((x + m - 1) // m) * m


def _cdiv(a, b):
    return (a + b - 1) // b


def _choose_tile(b, batch_tile):
    """Pick a batch tile that (a) is a multiple of 8 (f32 sublane rule),
    (b) balances tiles to minimize batch-padding waste for awkward sizes, and
    (c) yields at least 2 grid steps when possible so the 'parallel' batch
    axis can split across both v7x TensorCores."""
    batch_tile = max(8, _round_up(int(batch_tile), 8))
    n_tiles = max(1, _cdiv(b, batch_tile))
    if n_tiles == 1 and b > 8:
        n_tiles = 2
    tb = _round_up(_cdiv(b, n_tiles), 8)
    b_pad = _round_up(b, tb)
    return tb, b_pad


def _policy_mlp_kernel(x_ref,
                       w1_ref, b1_ref,
                       w2_ref, b2_ref,
                       w3_ref, b3_ref,
                       w4_ref, b4_ref,
                       o_ref):
    # Weights: bf16 (VMEM-resident).  Activations: f32, cast to bf16 only at
    # the MXU inputs; accumulation via preferred_element_type=f32.  Elementwise
    # math (bias add, ReLU, tanh) stays f32 (v5e VPU/EUP have no bf16 path).
    x = x_ref[...].astype(jnp.bfloat16)

    # Layer 1: Linear(48 -> 256) + ReLU   (Dropout(0.1) -> identity at eval)
    h = jnp.dot(x, w1_ref[...], preferred_element_type=jnp.float32)
    h = jnp.maximum(h + b1_ref[...], 0.0)

    # Layer 2: Linear(256 -> 256) + ReLU  (Dropout(0.1) -> identity at eval)
    h = jnp.dot(h.astype(jnp.bfloat16), w2_ref[...],
                preferred_element_type=jnp.float32)
    h = jnp.maximum(h + b2_ref[...], 0.0)

    # Layer 3: Linear(256 -> 256) + ReLU
    h = jnp.dot(h.astype(jnp.bfloat16), w3_ref[...],
                preferred_element_type=jnp.float32)
    h = jnp.maximum(h + b3_ref[...], 0.0)

    # Layer 4: Linear(256 -> 12, padded to 128 lanes) + Tanh
    out = jnp.dot(h.astype(jnp.bfloat16), w4_ref[...],
                  preferred_element_type=jnp.float32)
    o_ref[...] = jnp.tanh(out + b4_ref[...]).astype(o_ref.dtype)


def policy_network_forward(obs, params, batch_tile=DEFAULT_BATCH_TILE):
    """obs: [B, OBS_DIM] float32 -> actions: [B, ACTION_DIM] float32."""
    b = obs.shape[0]
    tb, b_pad = _choose_tile(b, batch_tile)

    obs_in = obs.astype(jnp.float32)
    if b_pad != b:
        obs_in = jnp.zeros((b_pad, OBS_DIM), jnp.float32).at[:b].set(obs_in)

    const = lambda i: (0, 0)  # weights/biases resident across all batch tiles

    weight_keys = ("w1", "b1", "w2", "b2", "w3", "b3", "w4", "b4")
    weight_bytes = sum(int(params[k].size) * params[k].dtype.itemsize
                       for k in weight_keys)
    cost = pl.CostEstimate(
        flops=2 * b_pad * (OBS_DIM * HIDDEN_DIM
                           + 2 * HIDDEN_DIM * HIDDEN_DIM
                           + HIDDEN_DIM * OUT_PAD),
        transcendentals=b_pad * OUT_PAD,  # tanh
        bytes_accessed=b_pad * OBS_DIM * 4 + weight_bytes + b_pad * OUT_PAD * 2,
    )

    out_pad = pl.pallas_call(
        _policy_mlp_kernel,
        out_shape=jax.ShapeDtypeStruct((b_pad, OUT_PAD), jnp.bfloat16),
        grid=(b_pad // tb,),
        in_specs=[
            pl.BlockSpec((tb, OBS_DIM), lambda i: (i, 0)),        # obs tile
            pl.BlockSpec((OBS_DIM, HIDDEN_DIM), const),           # w1 (48,256)
            pl.BlockSpec((1, HIDDEN_DIM), const),                  # b1
            pl.BlockSpec((HIDDEN_DIM, HIDDEN_DIM), const),         # w2
            pl.BlockSpec((1, HIDDEN_DIM), const),                  # b2
            pl.BlockSpec((HIDDEN_DIM, HIDDEN_DIM), const),         # w3
            pl.BlockSpec((1, HIDDEN_DIM), const),                  # b3
            pl.BlockSpec((HIDDEN_DIM, OUT_PAD), const),            # w4 (256,128)
            pl.BlockSpec((1, OUT_PAD), const),                     # b4
        ],
        out_specs=pl.BlockSpec((tb, OUT_PAD), lambda i: (i, 0)),
        compiler_params=pltpu.CompilerParams(
            # Independent batch tiles -> shard grid across v7x's 2 TensorCores.
            dimension_semantics=("parallel",),
            # Insurance for v5e's 16 MiB scoped-VMEM default at tb=2048.
            vmem_limit_bytes=32 * 1024 * 1024,
        ),
        cost_estimate=cost,
    )(obs_in,
      params["w1"], params["b1"],
      params["w2"], params["b2"],
      params["w3"], params["b3"],
      params["w4"], params["b4"])

    return out_pad[:b, :ACTION_DIM].astype(jnp.float32)


def xavier_uniform(key, fan_in, fan_out):
    # Matches torch.nn.init.xavier_uniform_ (gain=1.0).
    limit = jnp.sqrt(6.0 / (fan_in + fan_out))
    return jax.random.uniform(key, (fan_in, fan_out), jnp.float32, -limit, limit)


def init_params(key):
    k1, k2, k3, k4 = jax.random.split(key, 4)
    w1 = xavier_uniform(k1, OBS_DIM, HIDDEN_DIM)
    w2 = xavier_uniform(k2, HIDDEN_DIM, HIDDEN_DIM)
    w3 = xavier_uniform(k3, HIDDEN_DIM, HIDDEN_DIM)
    w4 = xavier_uniform(k4, HIDDEN_DIM, ACTION_DIM)
    # Only the output layer is lane-padded (N: 12 -> 128); padded cols are zero
    # so they contribute tanh(0)=0 and are sliced off in the wrapper.
    w4_p = jnp.zeros((HIDDEN_DIM, OUT_PAD), jnp.float32).at[:, :ACTION_DIM].set(w4)
    b4_p = jnp.zeros((1, OUT_PAD), jnp.float32).at[:, :ACTION_DIM].set(0.01)
    return {
        # bf16 weights (half DMA, full-rate bf16 MXU path); biases stay f32.
        # NOTE: bf16 weights drift from the fp32 PyTorch reference; acceptable
        # for inference, and the in-script check uses the same recipe.
        "w1": w1.astype(jnp.bfloat16),
        "b1": jnp.full((1, HIDDEN_DIM), 0.01, jnp.float32),
        "w2": w2.astype(jnp.bfloat16),
        "b2": jnp.full((1, HIDDEN_DIM), 0.01, jnp.float32),
        "w3": w3.astype(jnp.bfloat16),
        "b3": jnp.full((1, HIDDEN_DIM), 0.01, jnp.float32),
        "w4": w4_p.astype(jnp.bfloat16),
        "b4": b4_p,
    }


def _reference_forward(obs, p):
    # Same precision recipe as the kernel (bf16 matmul inputs, f32 accum,
    # bf16 output store) so the check isolates kernel correctness.
    def lin(h, w, bias):
        return jnp.dot(h.astype(jnp.bfloat16), w,
                       preferred_element_type=jnp.float32) + bias

    h = jnp.maximum(lin(obs.astype(jnp.float32), p["w1"], p["b1"]), 0.0)
    h = jnp.maximum(lin(h, p["w2"], p["b2"]), 0.0)
    h = jnp.maximum(lin(h, p["w3"], p["b3"]), 0.0)
    out = jnp.tanh(lin(h, p["w4"], p["b4"]))
    out = out.astype(jnp.bfloat16).astype(jnp.float32)   # mirror bf16 store
    return out[:, :ACTION_DIM]


if __name__ == "__main__":
    key = jax.random.PRNGKey(0)
    pkey, okey1, okey2 = jax.random.split(key, 3)
    params = init_params(pkey)

    # Small-shape check (batch=2): one 8-row tile, grid of 1.
    obs_small = jax.random.normal(okey1, (2, OBS_DIM), jnp.float32)
    act_small = policy_network_forward(obs_small, params)
    jax.block_until_ready(act_small)
    ref_small = _reference_forward(obs_small, params)
    assert act_small.shape == (2, ACTION_DIM)
    assert jnp.allclose(act_small, ref_small, atol=2e-3, rtol=2e-3)

    # Multi-tile check (batch=300): balanced tiles -> tb=152, padded to 304,
    # grid of 2 (exercises batch padding + the >=2-step v7x split).
    obs_big = jax.random.normal(okey2, (300, OBS_DIM), jnp.float32)
    act_big = policy_network_forward(obs_big, params)
    jax.block_until_ready(act_big)
    ref_big = _reference_forward(obs_big, params)
    assert act_big.shape == (300, ACTION_DIM)
    assert jnp.allclose(act_big, ref_big, atol=2e-3, rtol=2e-3)

    print("KERNEL_OK")
</pallas_src>

<mosaic_0001>
module attributes {stable_mosaic.version = 11 : i64} {
  func.func @_policy_mlp_kernel(%arg0: i32, %arg1: memref<8x48xf32, #tpu.memory_space<vmem>>, %arg2: memref<48x256xbf16, #tpu.memory_space<vmem>>, %arg3: memref<1x256xf32, #tpu.memory_space<vmem>>, %arg4: memref<256x256xbf16, #tpu.memory_space<vmem>>, %arg5: memref<1x256xf32, #tpu.memory_space<vmem>>, %arg6: memref<256x256xbf16, #tpu.memory_space<vmem>>, %arg7: memref<1x256xf32, #tpu.memory_space<vmem>>, %arg8: memref<256x128xbf16, #tpu.memory_space<vmem>>, %arg9: memref<1x128xf32, #tpu.memory_space<vmem>>, %arg10: memref<8x128xbf16, #tpu.memory_space<vmem>>) attributes {dimension_semantics = [#tpu.dimension_semantics<parallel>], iteration_bounds = array<i64: 1>, scalar_prefetch = 0 : i64, scratch_operands = 0 : i64, tpu.core_type = #tpu.core_type<tc>, window_params = [{transform_indices = @transform_0, window_bounds = array<i64: 8, 48>}, {pipeline_mode = #tpu.pipeline_mode<synchronous>, transform_indices = @transform_1, window_bounds = array<i64: 48, 256>}, {pipeline_mode = #tpu.pipeline_mode<synchronous>, transform_indices = @transform_2, window_bounds = array<i64: 1, 256>}, {pipeline_mode = #tpu.pipeline_mode<synchronous>, transform_indices = @transform_3, window_bounds = array<i64: 256, 256>}, {pipeline_mode = #tpu.pipeline_mode<synchronous>, transform_indices = @transform_4, window_bounds = array<i64: 1, 256>}, {pipeline_mode = #tpu.pipeline_mode<synchronous>, transform_indices = @transform_5, window_bounds = array<i64: 256, 256>}, {pipeline_mode = #tpu.pipeline_mode<synchronous>, transform_indices = @transform_6, window_bounds = array<i64: 1, 256>}, {pipeline_mode = #tpu.pipeline_mode<synchronous>, transform_indices = @transform_7, window_bounds = array<i64: 256, 128>}, {pipeline_mode = #tpu.pipeline_mode<synchronous>, transform_indices = @transform_8, window_bounds = array<i64: 1, 128>}, {transform_indices = @transform_9, window_bounds = array<i64: 8, 128>}]} {
    %c0 = arith.constant 0 : index
    %c0_0 = arith.constant 0 : index
    %0 = vector.load %arg1[%c0, %c0_0] : memref<8x48xf32, #tpu.memory_space<vmem>>, vector<8x48xf32>
    %1 = arith.truncf %0 : vector<8x48xf32> to vector<8x48xbf16>
    %c0_1 = arith.constant 0 : index
    %c0_2 = arith.constant 0 : index
    %2 = vector.load %arg2[%c0_1, %c0_2] : memref<48x256xbf16, #tpu.memory_space<vmem>>, vector<48x256xbf16>
    %cst = arith.constant dense<0.000000e+00> : vector<8x256xf32>
    %3 = tpu.matmul %1, %2, %cst {dimension_numbers = #tpu.dot_dimension_numbers<[1], [0], [0], [1], [0, 0, 1, 1], [], []>} : vector<8x48xbf16>, vector<48x256xbf16>, vector<8x256xf32> -> vector<8x256xf32>
    %c0_3 = arith.constant 0 : index
    %c0_4 = arith.constant 0 : index
    %4 = vector.load %arg3[%c0_3, %c0_4] : memref<1x256xf32, #tpu.memory_space<vmem>>, vector<1x256xf32>
    %5 = vector.broadcast %4 : vector<1x256xf32> to vector<8x256xf32>
    %6 = arith.addf %3, %5 : vector<8x256xf32>
    %cst_5 = arith.constant 0.000000e+00 : f32
    %7 = vector.broadcast %cst_5 : f32 to vector<8x256xf32>
    %8 = arith.maximumf %6, %7 : vector<8x256xf32>
    %9 = arith.truncf %8 : vector<8x256xf32> to vector<8x256xbf16>
    %c0_6 = arith.constant 0 : index
    %c0_7 = arith.constant 0 : index
    %10 = vector.load %arg4[%c0_6, %c0_7] : memref<256x256xbf16, #tpu.memory_space<vmem>>, vector<256x256xbf16>
    %cst_8 = arith.constant dense<0.000000e+00> : vector<8x256xf32>
    %11 = tpu.matmul %9, %10, %cst_8 {dimension_numbers = #tpu.dot_dimension_numbers<[1], [0], [0], [1], [0, 0, 1, 1], [], []>} : vector<8x256xbf16>, vector<256x256xbf16>, vector<8x256xf32> -> vector<8x256xf32>
    %c0_9 = arith.constant 0 : index
    %c0_10 = arith.constant 0 : index
    %12 = vector.load %arg5[%c0_9, %c0_10] : memref<1x256xf32, #tpu.memory_space<vmem>>, vector<1x256xf32>
    %13 = vector.broadcast %12 : vector<1x256xf32> to vector<8x256xf32>
    %14 = arith.addf %11, %13 : vector<8x256xf32>
    %cst_11 = arith.constant 0.000000e+00 : f32
    %15 = vector.broadcast %cst_11 : f32 to vector<8x256xf32>
    %16 = arith.maximumf %14, %15 : vector<8x256xf32>
    %17 = arith.truncf %16 : vector<8x256xf32> to vector<8x256xbf16>
    %c0_12 = arith.constant 0 : index
    %c0_13 = arith.constant 0 : index
    %18 = vector.load %arg6[%c0_12, %c0_13] : memref<256x256xbf16, #tpu.memory_space<vmem>>, vector<256x256xbf16>
    %cst_14 = arith.constant dense<0.000000e+00> : vector<8x256xf32>
    %19 = tpu.matmul %17, %18, %cst_14 {dimension_numbers = #tpu.dot_dimension_numbers<[1], [0], [0], [1], [0, 0, 1, 1], [], []>} : vector<8x256xbf16>, vector<256x256xbf16>, vector<8x256xf32> -> vector<8x256xf32>
    %c0_15 = arith.constant 0 : index
    %c0_16 = arith.constant 0 : index
    %20 = vector.load %arg7[%c0_15, %c0_16] : memref<1x256xf32, #tpu.memory_space<vmem>>, vector<1x256xf32>
    %21 = vector.broadcast %20 : vector<1x256xf32> to vector<8x256xf32>
    %22 = arith.addf %19, %21 : vector<8x256xf32>
    %cst_17 = arith.constant 0.000000e+00 : f32
    %23 = vector.broadcast %cst_17 : f32 to vector<8x256xf32>
    %24 = arith.maximumf %22, %23 : vector<8x256xf32>
    %25 = arith.truncf %24 : vector<8x256xf32> to vector<8x256xbf16>
    %c0_18 = arith.constant 0 : index
    %c0_19 = arith.constant 0 : index
    %26 = vector.load %arg8[%c0_18, %c0_19] : memref<256x128xbf16, #tpu.memory_space<vmem>>, vector<256x128xbf16>
    %cst_20 = arith.constant dense<0.000000e+00> : vector<8x128xf32>
    %27 = tpu.matmul %25, %26, %cst_20 {dimension_numbers = #tpu.dot_dimension_numbers<[1], [0], [0], [1], [0, 0, 1, 1], [], []>} : vector<8x256xbf16>, vector<256x128xbf16>, vector<8x128xf32> -> vector<8x128xf32>
    %c0_21 = arith.constant 0 : index
    %c0_22 = arith.constant 0 : index
    %28 = vector.load %arg9[%c0_21, %c0_22] : memref<1x128xf32, #tpu.memory_space<vmem>>, vector<1x128xf32>
    %29 = vector.broadcast %28 : vector<1x128xf32> to vector<8x128xf32>
    %30 = arith.addf %27, %29 : vector<8x128xf32>
    %31 = math.tanh %30 : vector<8x128xf32>
    %32 = arith.truncf %31 : vector<8x128xf32> to vector<8x128xbf16>
    %c0_23 = arith.constant 0 : index
    %c0_24 = arith.constant 0 : index
    %33 = vector.load %arg10[%c0_23, %c0_24] : memref<8x128xbf16, #tpu.memory_space<vmem>>, vector<8x128xbf16>
    tpu.vector_store %arg10[%c0_23, %c0_24], %32 {strides = array<i32>} : memref<8x128xbf16, #tpu.memory_space<vmem>>, vector<8x128xbf16>,
    return
  }
  func.func @transform_0(%arg0: i32) -> (i32, i32) {
    %c0_i32 = arith.constant 0 : i32
    %c0_i32_0 = arith.constant 0 : i32
    return %arg0, %c0_i32 : i32, i32
  }
  func.func @transform_1(%arg0: i32) -> (i32, i32) {
    %c0_i32 = arith.constant 0 : i32
    %c0_i32_0 = arith.constant 0 : i32
    %c0_i32_1 = arith.constant 0 : i32
    return %c0_i32, %c0_i32_0 : i32, i32
  }
  func.func @transform_2(%arg0: i32) -> (i32, i32) {
    %c0_i32 = arith.constant 0 : i32
    %c0_i32_0 = arith.constant 0 : i32
    %c0_i32_1 = arith.constant 0 : i32
    return %c0_i32, %c0_i32_0 : i32, i32
  }
  func.func @transform_3(%arg0: i32) -> (i32, i32) {
    %c0_i32 = arith.constant 0 : i32
    %c0_i32_0 = arith.constant 0 : i32
    %c0_i32_1 = arith.constant 0 : i32
    return %c0_i32, %c0_i32_0 : i32, i32
  }
  func.func @transform_4(%arg0: i32) -> (i32, i32) {
    %c0_i32 = arith.constant 0 : i32
    %c0_i32_0 = arith.constant 0 : i32
    %c0_i32_1 = arith.constant 0 : i32
    return %c0_i32, %c0_i32_0 : i32, i32
  }
  func.func @transform_5(%arg0: i32) -> (i32, i32) {
    %c0_i32 = arith.constant 0 : i32
    %c0_i32_0 = arith.constant 0 : i32
    %c0_i32_1 = arith.constant 0 : i32
    return %c0_i32, %c0_i32_0 : i32, i32
  }
  func.func @transform_6(%arg0: i32) -> (i32, i32) {
    %c0_i32 = arith.constant 0 : i32
    %c0_i32_0 = arith.constant 0 : i32
    %c0_i32_1 = arith.constant 0 : i32
    return %c0_i32, %c0_i32_0 : i32, i32
  }
  func.func @transform_7(%arg0: i32) -> (i32, i32) {
    %c0_i32 = arith.constant 0 : i32
    %c0_i32_0 = arith.constant 0 : i32
    %c0_i32_1 = arith.constant 0 : i32
    return %c0_i32, %c0_i32_0 : i32, i32
  }
  func.func @transform_8(%arg0: i32) -> (i32, i32) {
    %c0_i32 = arith.constant 0 : i32
    %c0_i32_0 = arith.constant 0 : i32
    %c0_i32_1 = arith.constant 0 : i32
    return %c0_i32, %c0_i32_0 : i32, i32
  }
  func.func @transform_9(%arg0: i32) -> (i32, i32) {
    %c0_i32 = arith.constant 0 : i32
    %c0_i32_0 = arith.constant 0 : i32
    return %arg0, %c0_i32 : i32, i32
  }
}

</mosaic_0001>

<llo_original>
// kernel: tpu_custom_call.1
$region0: #{tpu_custom_call.1}
  #allocation0 [shape = 'u32[]', space=smem, size = 0x4, offset = 0x4, fixed_abs, tag = 'smem constant byte address 0x4 - core index']
  #allocation1 [shape = 'u32[144,128]{1,0:T(1,128)}', space=vmem, size = 0x12000, scoped, tag = 'internal scratch']
  %s0 = inlined_call_operand.hbm [shape: f32[8,48], index: 0, kind: input, shape index: {}]
  %s1 = inlined_call_operand.hbm [shape: bf16[48,256], index: 1, kind: input, shape index: {}]
  %s2 = inlined_call_operand.vmem [shape: f32[1,256], index: 2, kind: input, shape index: {}]
  %s3 = inlined_call_operand.hbm [shape: bf16[256,256], index: 3, kind: input, shape index: {}]
  %s4 = inlined_call_operand.vmem [shape: f32[1,256], index: 4, kind: input, shape index: {}]
  %s5 = inlined_call_operand.hbm [shape: bf16[256,256], index: 5, kind: input, shape index: {}]
  %s6 = inlined_call_operand.vmem [shape: f32[1,256], index: 6, kind: input, shape index: {}]
  %s7 = inlined_call_operand.hbm [shape: bf16[256,128], index: 7, kind: input, shape index: {}]
  %s8 = inlined_call_operand.vmem [shape: f32[1,128], index: 8, kind: input, shape index: {}]
  %s9 = inlined_call_operand.hbm [shape: bf16[8,128], index: 9, kind: output, shape index: {}]
  %s10 = sld [smem:[#allocation0]]
  $region66: #{tpu_custom_call.1} parent=0
    _
  %s12 = ssub.s32 1, %s10
  %s13 = scalar_select 0, %s12, %s10
  $region1: #{tpu_custom_call.1} parent=0
    #allocation2 [shape = 'u8[4096]{0}', space=vmem, size = 0x1000, scoped, tag = 'input window, operand 0, single buffered']
    #allocation3 [shape = 's32[1]{0}', space=sflag, size = 0x4, scoped, tag = 'scoped memory for tpu_custom_call.1']
    #allocation4 [shape = 's32[1]{0}', space=sflag, size = 0x4, scoped, tag = 'scoped memory for tpu_custom_call.1']
    #allocation5 [shape = 'u8[24576]{0}', space=vmem, size = 0x6000, scoped, tag = 'input window, operand 1, single buffered']
    #allocation6 [shape = 's32[1]{0}', space=sflag, size = 0x4, scoped, tag = 'scoped memory for tpu_custom_call.1']
    #allocation7 [shape = 'u8[131072]{0}', space=vmem, size = 0x20000, scoped, tag = 'input window, operand 3, single buffered']
    #allocation8 [shape = 'u8[131072]{0}', space=vmem, size = 0x20000, scoped, tag = 'input window, operand 5, single buffered']
    #allocation9 [shape = 's32[1]{0}', space=sflag, size = 0x4, scoped, tag = 'scoped memory for tpu_custom_call.1']
    #allocation10 [shape = 'u8[65536]{0}', space=vmem, size = 0x10000, scoped, tag = 'input window, operand 7, single buffered']
    #allocation11 [shape = 'u8[2048]{0}', space=vmem, size = 0x800, scoped, tag = 'output window, operand 0, single buffered']
    %14 = vsyncpa [#allocation3], 0
    %15 = vsyncpa [#allocation6], 0
    %16 = vsyncpa [#allocation9], 0
    %17 = vsyncpa [#allocation4], 0
    // Predicated region
    $region2: #{tpu_custom_call.1} parent=1 // pred_check
      _
    $region3: #{tpu_custom_call.1} parent=1 // pred_check_branch
      %19 = sbr.rel (0) target = $region5
    $region4: #{tpu_custom_call.1} parent=1 // pred_region
      %s21 = ssub.s32 128, 128
      %22 = vsyncadd [#allocation3], %s21
      %s24 = sshll.u32 [#allocation2], 4
      %s25 = int_to_ptr.vmem [resolvable:$true] %s24
      %27 = dma.hbm_to_vmem [thread:$0]  %s0, 128, %s25, [#allocation3]
    $region5: #{tpu_custom_call.1} parent=1 // pred_fallthru
      _
    // Predicated region
    $region6: #{tpu_custom_call.1} parent=1 // pred_check
      _
    $region7: #{tpu_custom_call.1} parent=1 // pred_check_branch
      %29 = sbr.rel (0) target = $region9
    $region8: #{tpu_custom_call.1} parent=1 // pred_region
      %s31 = ssub.s32 768, 768
      %32 = vsyncadd [#allocation6], %s31
      %s33 = sshll.u32 [#allocation5], 4
      %s34 = int_to_ptr.vmem [resolvable:$true] %s33
      %39 = dma.hbm_to_vmem [thread:$0]  %s1, 768, %s34, [#allocation6], 128, 128, 8
    $region9: #{tpu_custom_call.1} parent=1 // pred_fallthru
      _
    // Predicated region
    $region10: #{tpu_custom_call.1} parent=1 // pred_check
      _
    $region11: #{tpu_custom_call.1} parent=1 // pred_check_branch
      %41 = sbr.rel (0) target = $region13
    $region12: #{tpu_custom_call.1} parent=1 // pred_region
      _
    $region13: #{tpu_custom_call.1} parent=1 // pred_fallthru
      _
    // Predicated region
    $region14: #{tpu_custom_call.1} parent=1 // pred_check
      _
    $region15: #{tpu_custom_call.1} parent=1 // pred_check_branch
      %43 = sbr.rel (0) target = $region17
    $region16: #{tpu_custom_call.1} parent=1 // pred_region
      %s45 = ssub.s32 4096, 4096
      %46 = vsyncadd [#allocation6], %s45
      %s47 = sshll.u32 [#allocation7], 4
      %s48 = int_to_ptr.vmem [resolvable:$true] %s47
      %53 = dma.hbm_to_vmem [thread:$0]  %s3, 4096, %s48, [#allocation6], 128, 128, 8
    $region17: #{tpu_custom_call.1} parent=1 // pred_fallthru
      _
    // Predicated region
    $region18: #{tpu_custom_call.1} parent=1 // pred_check
      _
    $region19: #{tpu_custom_call.1} parent=1 // pred_check_branch
      %55 = sbr.rel (0) target = $region21
    $region20: #{tpu_custom_call.1} parent=1 // pred_region
      _
    $region21: #{tpu_custom_call.1} parent=1 // pred_fallthru
      _
    // Predicated region
    $region22: #{tpu_custom_call.1} parent=1 // pred_check
      _
    $region23: #{tpu_custom_call.1} parent=1 // pred_check_branch
      %57 = sbr.rel (0) target = $region25
    $region24: #{tpu_custom_call.1} parent=1 // pred_region
      %s59 = ssub.s32 4096, 4096
      %60 = vsyncadd [#allocation9], %s59
      %s61 = sshll.u32 [#allocation8], 4
      %s62 = int_to_ptr.vmem [resolvable:$true] %s61
      %67 = dma.hbm_to_vmem [thread:$0]  %s5, 4096, %s62, [#allocation9], 128, 128, 8
    $region25: #{tpu_custom_call.1} parent=1 // pred_fallthru
      _
    // Predicated region
    $region26: #{tpu_custom_call.1} parent=1 // pred_check
      _
    $region27: #{tpu_custom_call.1} parent=1 // pred_check_branch
      %69 = sbr.rel (0) target = $region29
    $region28: #{tpu_custom_call.1} parent=1 // pred_region
      _
    $region29: #{tpu_custom_call.1} parent=1 // pred_fallthru
      _
    // Predicated region
    $region30: #{tpu_custom_call.1} parent=1 // pred_check
      _
    $region31: #{tpu_custom_call.1} parent=1 // pred_check_branch
      %71 = sbr.rel (0) target = $region33
    $region32: #{tpu_custom_call.1} parent=1 // pred_region
      %s73 = ssub.s32 2048, 2048
      %74 = vsyncadd [#allocation9], %s73
      %s75 = sshll.u32 [#allocation10], 4
      %s76 = int_to_ptr.vmem [resolvable:$true] %s75
      %81 = dma.hbm_to_vmem [thread:$0]  %s7, 2048, %s76, [#allocation9], 64, 64, 4
    $region33: #{tpu_custom_call.1} parent=1 // pred_fallthru
      _
    // Predicated region
    $region34: #{tpu_custom_call.1} parent=1 // pred_check
      _
    $region35: #{tpu_custom_call.1} parent=1 // pred_check_branch
      %83 = sbr.rel (0) target = $region37
    $region36: #{tpu_custom_call.1} parent=1 // pred_region
      _
    $region37: #{tpu_custom_call.1} parent=1 // pred_fallthru
      _
    // Predicated region
    $region38: #{tpu_custom_call.1} parent=1 // pred_check
      _
    $region39: #{tpu_custom_call.1} parent=1 // pred_check_branch
      %85 = sbr.rel (0) target = $region41
    $region40: #{tpu_custom_call.1} parent=1 // pred_region
      %86 = dma.done [#allocation3], 128
    $region41: #{tpu_custom_call.1} parent=1 // pred_fallthru
      _
    // Predicated region
    $region42: #{tpu_custom_call.1} parent=1 // pred_check
      _
    $region43: #{tpu_custom_call.1} parent=1 // pred_check_branch
      %88 = sbr.rel (0) target = $region45
    $region44: #{tpu_custom_call.1} parent=1 // pred_region
      %89 = dma.done [#allocation6], 768
    $region45: #{tpu_custom_call.1} parent=1 // pred_fallthru
      _
    // Predicated region
    $region46: #{tpu_custom_call.1} parent=1 // pred_check
      _
    $region47: #{tpu_custom_call.1} parent=1 // pred_check_branch
      %91 = sbr.rel (0) target = $region49
    $region48: #{tpu_custom_call.1} parent=1 // pred_region
      %92 = dma.done [#allocation6], 4096
    $region49: #{tpu_custom_call.1} parent=1 // pred_fallthru
      _
    // Predicated region
    $region50: #{tpu_custom_call.1} parent=1 // pred_check
      _
    $region51: #{tpu_custom_call.1} parent=1 // pred_check_branch
      %94 = sbr.rel (0) target = $region53
    $region52: #{tpu_custom_call.1} parent=1 // pred_region
      %95 = dma.done [#allocation9], 4096
    $region53: #{tpu_custom_call.1} parent=1 // pred_fallthru
      _
    // Predicated region
    $region54: #{tpu_custom_call.1} parent=1 // pred_check
      _
    $region55: #{tpu_custom_call.1} parent=1 // pred_check_branch
      %97 = sbr.rel (0) target = $region57
    $region56: #{tpu_custom_call.1} parent=1 // pred_region
      %98 = dma.done [#allocation9], 2048
    $region57: #{tpu_custom_call.1} parent=1 // pred_fallthru
      _
    %v100 = vld [vmem:[#allocation2] sm:$0xff]
    %v101 = vpack.c.bf16 %v100, %v100
    %v102 = vld [vmem:[#allocation5] sm:$0xff]
    %v103 = vld [vmem:[#allocation5 + $0x8] sm:$0xff]
    %v104 = vld [vmem:[#allocation5 + $0x10] sm:$0xff]
    %v105 = vld [vmem:[#allocation5 + $0x18] sm:$0xff]
    %v106 = vld [vmem:[#allocation5 + $0x20] sm:$0xff]
    %v107 = vld [vmem:[#allocation5 + $0x28] sm:$0xff]
    %v108 = vld [vmem:[%s2] sm:$0x3]
    %v110 = vlaneseq
    %v111 = vshrl.u32 %v110, 7
    %v112 = vsub.s32 0, %v111
    %v113 = vrot.slane %v108, %v112
    %v114 = vlaneseq
    %v115 = vshrl.u32 %v114, 7
    %v116 = vsub.s32 1, %v115
    %v117 = vrot.slane %v108, %v116
    %v126 = vunpack.c.l.b16 %v102
    %v127 = vunpack.c.h.b16 %v102
    %v128 = vunpack.c.l.b16 %v103
    %v129 = vunpack.c.h.b16 %v103
    %v130 = vunpack.c.l.b16 %v104
    %v131 = vunpack.c.h.b16 %v104
    %v132 = vunpack.c.l.b16 %v105
    %v133 = vunpack.c.h.b16 %v105
    %v134 = vunpack.c.l.b16 %v106
    %v135 = vunpack.c.h.b16 %v106
    %v136 = vunpack.c.l.b16 %v107
    %v137 = vunpack.c.h.b16 %v107
    %v138 = vpack.c.b16 %v128, %v126
    %v139 = vpack.c.b16 %v129, %v127
    %v140 = vpack.c.b16 %v132, %v130
    %v141 = vpack.c.b16 %v133, %v131
    %v142 = vpack.c.b16 %v136, %v134
    %v143 = vpack.c.b16 %v137, %v135
    %vm150 = vcmask 392192
    %v152 = vsel %vm150, %v101, 0
    %154 = vmatprep.subr.bf16.mxu0 %v139
    %155 = vmatpush1.bf16.msra.mxu0 %v138
    %156 = vmatprep.subr.bf16.mxu0 %v141
    %157 = vmatpush1.bf16.msra.mxu0 %v140
    %158 = vmatprep.subr.bf16.mxu0 %v143
    %159 = vmatpush1.bf16.msra.mxu0 %v142
    %160 = vmatprep.subr.bf16.mxu0 0
    %161 = vmatpush1.bf16.msra.mxu0 0
    %162 = vmatprep.subr.bf16.mxu0 0
    %163 = vmatpush1.bf16.msra.mxu0 0
    %164 = vmatprep.subr.bf16.mxu0 0
    %165 = vmatpush1.bf16.msra.mxu0 0
    %166 = vmatprep.subr.bf16.mxu0 0
    %167 = vmatpush1.bf16.msra.mxu0 0
    %168 = vmatprep.subr.bf16.mxu0 0
    %169 = vmatpush1.bf16.msra.mxu0 0
    %170 = vmatprep.subr.bf16.mxu0 0
    %171 = vmatpush1.bf16.msra.mxu0 0
    %172 = vmatprep.subr.bf16.mxu0 0
    %173 = vmatpush1.bf16.msra.mxu0 0
    %174 = vmatprep.subr.bf16.mxu0 0
    %175 = vmatpush1.bf16.msra.mxu0 0
    %176 = vmatprep.subr.bf16.mxu0 0
    %177 = vmatpush1.bf16.msra.mxu0 0
    %178 = vmatprep.subr.bf16.mxu0 0
    %179 = vmatpush1.bf16.msra.mxu0 0
    %180 = vmatprep.subr.bf16.mxu0 0
    %181 = vmatpush1.bf16.msra.mxu0 0
    %182 = vmatprep.subr.bf16.mxu0 0
    %183 = vmatpush1.bf16.msra.mxu0 0
    %184 = vmatprep.subr.bf16.mxu0 0
    %185 = vmatpush1.bf16.msra.mxu0 0
    %186 = vmatprep.mubr.bf16.mxu0 0
    %187 = vmatmul.mubr.bf16.gmra.mrb[0].mxu0 %v152
    %v188 = vpop.f32.mrb[0].mxu0
    %v189 = vadd.f32 %v113, %v188
    %v190 = vpop.f32.mrb[0].mxu0
    %v191 = vadd.f32 %v117, %v190
    %v192 = vpop.f32.mrb[0].mxu0
    %v193 = vpop.f32.mrb[0].mxu0
    %194 = vdwg.mxu0
    %v195 = vmax.f32 %v189, 0.0
    %v196 = vmax.f32 %v191, 0.0
    %v197 = vpack.c.bf16 %v195, %v195
    %v198 = vpack.c.bf16 %v196, %v196
    %v199 = vld [vmem:[#allocation7] sm:$0xff]
    %v200 = vld [vmem:[#allocation7 + $0x8] sm:$0xff]
    %v201 = vld [vmem:[#allocation7 + $0x10] sm:$0xff]
    %v202 = vld [vmem:[#allocation7 + $0x18] sm:$0xff]
    %v203 = vld [vmem:[#allocation7 + $0x20] sm:$0xff]
    %v204 = vld [vmem:[#allocation7 + $0x28] sm:$0xff]
    %v205 = vld [vmem:[#allocation7 + $0x30] sm:$0xff]
    %v206 = vld [vmem:[#allocation7 + $0x38] sm:$0xff]
    %v207 = vld [vmem:[#allocation7 + $0x40] sm:$0xff]
    %v208 = vld [vmem:[#allocation7 + $0x48] sm:$0xff]
    %v209 = vld [vmem:[#allocation7 + $0x50] sm:$0xff]
    %v210 = vld [vmem:[#allocation7 + $0x58] sm:$0xff]
    %v211 = vld [vmem:[#allocation7 + $0x60] sm:$0xff]
    %v212 = vld [vmem:[#allocation7 + $0x68] sm:$0xff]
    %v213 = vld [vmem:[#allocation7 + $0x70] sm:$0xff]
    %v214 = vld [vmem:[#allocation7 + $0x78] sm:$0xff]
    %v215 = vld [vmem:[#allocation7 + $0x80] sm:$0xff]
    %v216 = vld [vmem:[#allocation7 + $0x88] sm:$0xff]
    %v217 = vld [vmem:[#allocation7 + $0x90] sm:$0xff]
    %v218 = vld [vmem:[#allocation7 + $0x98] sm:$0xff]
    %v219 = vld [vmem:[#allocation7 + $0xa0] sm:$0xff]
    %v220 = vld [vmem:[#allocation7 + $0xa8] sm:$0xff]
    %v221 = vld [vmem:[#allocation7 + $0xb0] sm:$0xff]
    %v222 = vld [vmem:[#allocation7 + $0xb8] sm:$0xff]
    %v223 = vld [vmem:[#allocation7 + $0xc0] sm:$0xff]
    %v224 = vld [vmem:[#allocation7 + $0xc8] sm:$0xff]
    %v225 = vld [vmem:[#allocation7 + $0xd0] sm:$0xff]
    %v226 = vld [vmem:[#allocation7 + $0xd8] sm:$0xff]
    %v227 = vld [vmem:[#allocation7 + $0xe0] sm:$0xff]
    %v228 = vld [vmem:[#allocation7 + $0xe8] sm:$0xff]
    %v229 = vld [vmem:[#allocation7 + $0xf0] sm:$0xff]
    %v230 = vld [vmem:[#allocation7 + $0xf8] sm:$0xff]
    %v231 = vld [vmem:[%s4] sm:$0x3]
    %v233 = vlaneseq
    %v234 = vshrl.u32 %v233, 7
    %v235 = vsub.s32 0, %v234
    %v236 = vrot.slane %v231, %v235
    %v237 = vlaneseq
    %v238 = vshrl.u32 %v237, 7
    %v239 = vsub.s32 1, %v238
    %v240 = vrot.slane %v231, %v239
    %v275 = vunpack.c.l.b16 %v199
    %v276 = vunpack.c.h.b16 %v199
    %v277 = vunpack.c.l.b16 %v200
    %v278 = vunpack.c.h.b16 %v200
    %v279 = vunpack.c.l.b16 %v201
    %v280 = vunpack.c.h.b16 %v201
    %v281 = vunpack.c.l.b16 %v202
    %v282 = vunpack.c.h.b16 %v202
    %v283 = vunpack.c.l.b16 %v203
    %v284 = vunpack.c.h.b16 %v203
    %v285 = vunpack.c.l.b16 %v204
    %v286 = vunpack.c.h.b16 %v204
    %v287 = vunpack.c.l.b16 %v205
    %v288 = vunpack.c.h.b16 %v205
    %v289 = vunpack.c.l.b16 %v206
    %v290 = vunpack.c.h.b16 %v206
    %v291 = vunpack.c.l.b16 %v207
    %v292 = vunpack.c.h.b16 %v207
    %v293 = vunpack.c.l.b16 %v208
    %v294 = vunpack.c.h.b16 %v208
    %v295 = vunpack.c.l.b16 %v209
    %v296 = vunpack.c.h.b16 %v209
    %v297 = vunpack.c.l.b16 %v210
    %v298 = vunpack.c.h.b16 %v210
    %v299 = vunpack.c.l.b16 %v211
    %v300 = vunpack.c.h.b16 %v211
    %v301 = vunpack.c.l.b16 %v212
    %v302 = vunpack.c.h.b16 %v212
    %v303 = vunpack.c.l.b16 %v213
    %v304 = vunpack.c.h.b16 %v213
    %v305 = vunpack.c.l.b16 %v214
    %v306 = vunpack.c.h.b16 %v214
    %v307 = vunpack.c.l.b16 %v215
    %v308 = vunpack.c.h.b16 %v215
    %v309 = vunpack.c.l.b16 %v216
    %v310 = vunpack.c.h.b16 %v216
    %v311 = vunpack.c.l.b16 %v217
    %v312 = vunpack.c.h.b16 %v217
    %v313 = vunpack.c.l.b16 %v218
    %v314 = vunpack.c.h.b16 %v218
    %v315 = vunpack.c.l.b16 %v219
    %v316 = vunpack.c.h.b16 %v219
    %v317 = vunpack.c.l.b16 %v220
    %v318 = vunpack.c.h.b16 %v220
    %v319 = vunpack.c.l.b16 %v221
    %v320 = vunpack.c.h.b16 %v221
    %v321 = vunpack.c.l.b16 %v222
    %v322 = vunpack.c.h.b16 %v222
    %v323 = vunpack.c.l.b16 %v223
    %v324 = vunpack.c.h.b16 %v223
    %v325 = vunpack.c.l.b16 %v224
    %v326 = vunpack.c.h.b16 %v224
    %v327 = vunpack.c.l.b16 %v225
    %v328 = vunpack.c.h.b16 %v225
    %v329 = vunpack.c.l.b16 %v226
    %v330 = vunpack.c.h.b16 %v226
    %v331 = vunpack.c.l.b16 %v227
    %v332 = vunpack.c.h.b16 %v227
    %v333 = vunpack.c.l.b16 %v228
    %v334 = vunpack.c.h.b16 %v228
    %v335 = vunpack.c.l.b16 %v229
    %v336 = vunpack.c.h.b16 %v229
    %v337 = vunpack.c.l.b16 %v230
    %v338 = vunpack.c.h.b16 %v230
    %v339 = vpack.c.b16 %v277, %v275
    %v340 = vpack.c.b16 %v278, %v276
    %v341 = vpack.c.b16 %v281, %v279
    %v342 = vpack.c.b16 %v282, %v280
    %v343 = vpack.c.b16 %v285, %v283
    %v344 = vpack.c.b16 %v286, %v284
    %v345 = vpack.c.b16 %v289, %v287
    %v346 = vpack.c.b16 %v290, %v288
    %v347 = vpack.c.b16 %v293, %v291
    %v348 = vpack.c.b16 %v294, %v292
    %v349 = vpack.c.b16 %v297, %v295
    %v350 = vpack.c.b16 %v298, %v296
    %v351 = vpack.c.b16 %v301, %v299
    %v352 = vpack.c.b16 %v302, %v300
    %v353 = vpack.c.b16 %v305, %v303
    %v354 = vpack.c.b16 %v306, %v304
    %v355 = vpack.c.b16 %v309, %v307
    %v356 = vpack.c.b16 %v310, %v308
    %v357 = vpack.c.b16 %v313, %v311
    %v358 = vpack.c.b16 %v314, %v312
    %v359 = vpack.c.b16 %v317, %v315
    %v360 = vpack.c.b16 %v318, %v316
    %v361 = vpack.c.b16 %v321, %v319
    %v362 = vpack.c.b16 %v322, %v320
    %v363 = vpack.c.b16 %v325, %v323
    %v364 = vpack.c.b16 %v326, %v324
    %v365 = vpack.c.b16 %v329, %v327
    %v366 = vpack.c.b16 %v330, %v328
    %v367 = vpack.c.b16 %v333, %v331
    %v368 = vpack.c.b16 %v334, %v332
    %v369 = vpack.c.b16 %v337, %v335
    %v370 = vpack.c.b16 %v338, %v336
    %403 = vmatprep.subr.bf16.mxu0 %v340
    %404 = vmatpush1.bf16.msra.mxu0 %v339
    %405 = vmatprep.subr.bf16.mxu0 %v342
    %406 = vmatpush1.bf16.msra.mxu0 %v341
    %407 = vmatprep.subr.bf16.mxu0 %v344
    %408 = vmatpush1.bf16.msra.mxu0 %v343
    %409 = vmatprep.subr.bf16.mxu0 %v346
    %410 = vmatpush1.bf16.msra.mxu0 %v345
    %411 = vmatprep.subr.bf16.mxu0 %v348
    %412 = vmatpush1.bf16.msra.mxu0 %v347
    %413 = vmatprep.subr.bf16.mxu0 %v350
    %414 = vmatpush1.bf16.msra.mxu0 %v349
    %415 = vmatprep.subr.bf16.mxu0 %v352
    %416 = vmatpush1.bf16.msra.mxu0 %v351
    %417 = vmatprep.subr.bf16.mxu0 %v354
    %418 = vmatpush1.bf16.msra.mxu0 %v353
    %419 = vmatprep.subr.bf16.mxu0 %v356
    %420 = vmatpush1.bf16.msra.mxu0 %v355
    %421 = vmatprep.subr.bf16.mxu0 %v358
    %422 = vmatpush1.bf16.msra.mxu0 %v357
    %423 = vmatprep.subr.bf16.mxu0 %v360
    %424 = vmatpush1.bf16.msra.mxu0 %v359
    %425 = vmatprep.subr.bf16.mxu0 %v362
    %426 = vmatpush1.bf16.msra.mxu0 %v361
    %427 = vmatprep.subr.bf16.mxu0 %v364
    %428 = vmatpush1.bf16.msra.mxu0 %v363
    %429 = vmatprep.subr.bf16.mxu0 %v366
    %430 = vmatpush1.bf16.msra.mxu0 %v365
    %431 = vmatprep.subr.bf16.mxu0 %v368
    %432 = vmatpush1.bf16.msra.mxu0 %v367
    %433 = vmatprep.subr.bf16.mxu0 %v370
    %434 = vmatpush1.bf16.msra.mxu0 %v369
    %435 = vmatprep.mubr.bf16.mxu0 %v198
    %436 = vmatmul.mubr.bf16.gmra.mrb[0].mxu0 %v197
    %v437 = vpop.f32.mrb[0].mxu0
    %v438 = vadd.f32 %v236, %v437
    %v439 = vpop.f32.mrb[0].mxu0
    %v440 = vadd.f32 %v240, %v439
    %v441 = vpop.f32.mrb[0].mxu0
    %v442 = vpop.f32.mrb[0].mxu0
    %443 = vdwg.mxu0
    %v444 = vmax.f32 %v438, 0.0
    %v445 = vmax.f32 %v440, 0.0
    %v446 = vpack.c.bf16 %v444, %v444
    %v447 = vpack.c.bf16 %v445, %v445
    %v448 = vld [vmem:[#allocation8] sm:$0xff]
    %v449 = vld [vmem:[#allocation8 + $0x8] sm:$0xff]
    %v450 = vld [vmem:[#allocation8 + $0x10] sm:$0xff]
    %v451 = vld [vmem:[#allocation8 + $0x18] sm:$0xff]
    %v452 = vld [vmem:[#allocation8 + $0x20] sm:$0xff]
    %v453 = vld [vmem:[#allocation8 + $0x28] sm:$0xff]
    %v454 = vld [vmem:[#allocation8 + $0x30] sm:$0xff]
    %v455 = vld [vmem:[#allocation8 + $0x38] sm:$0xff]
    %v456 = vld [vmem:[#allocation8 + $0x40] sm:$0xff]
    %v457 = vld [vmem:[#allocation8 + $0x48] sm:$0xff]
    %v458 = vld [vmem:[#allocation8 + $0x50] sm:$0xff]
    %v459 = vld [vmem:[#allocation8 + $0x58] sm:$0xff]
    %v460 = vld [vmem:[#allocation8 + $0x60] sm:$0xff]
    %v461 = vld [vmem:[#allocation8 + $0x68] sm:$0xff]
    %v462 = vld [vmem:[#allocation8 + $0x70] sm:$0xff]
    %v463 = vld [vmem:[#allocation8 + $0x78] sm:$0xff]
    %v464 = vld [vmem:[#allocation8 + $0x80] sm:$0xff]
    %v465 = vld [vmem:[#allocation8 + $0x88] sm:$0xff]
    %v466 = vld [vmem:[#allocation8 + $0x90] sm:$0xff]
    %v467 = vld [vmem:[#allocation8 + $0x98] sm:$0xff]
    %v468 = vld [vmem:[#allocation8 + $0xa0] sm:$0xff]
    %v469 = vld [vmem:[#allocation8 + $0xa8] sm:$0xff]
    %v470 = vld [vmem:[#allocation8 + $0xb0] sm:$0xff]
    %v471 = vld [vmem:[#allocation8 + $0xb8] sm:$0xff]
    %v472 = vld [vmem:[#allocation8 + $0xc0] sm:$0xff]
    %v473 = vld [vmem:[#allocation8 + $0xc8] sm:$0xff]
    %v474 = vld [vmem:[#allocation8 + $0xd0] sm:$0xff]
    %v475 = vld [vmem:[#allocation8 + $0xd8] sm:$0xff]
    %v476 = vld [vmem:[#allocation8 + $0xe0] sm:$0xff]
    %v477 = vld [vmem:[#allocation8 + $0xe8] sm:$0xff]
    %v478 = vld [vmem:[#allocation8 + $0xf0] sm:$0xff]
    %v479 = vld [vmem:[#allocation8 + $0xf8] sm:$0xff]
    %v480 = vld [vmem:[%s6] sm:$0x3]
    %v482 = vlaneseq
    %v483 = vshrl.u32 %v482, 7
    %v484 = vsub.s32 0, %v483
    %v485 = vrot.slane %v480, %v484
    %v486 = vlaneseq
    %v487 = vshrl.u32 %v486, 7
    %v488 = vsub.s32 1, %v487
    %v489 = vrot.slane %v480, %v488
    %v524 = vunpack.c.l.b16 %v448
    %v525 = vunpack.c.h.b16 %v448
    %v526 = vunpack.c.l.b16 %v449
    %v527 = vunpack.c.h.b16 %v449
    %v528 = vunpack.c.l.b16 %v450
    %v529 = vunpack.c.h.b16 %v450
    %v530 = vunpack.c.l.b16 %v451
    %v531 = vunpack.c.h.b16 %v451
    %v532 = vunpack.c.l.b16 %v452
    %v533 = vunpack.c.h.b16 %v452
    %v534 = vunpack.c.l.b16 %v453
    %v535 = vunpack.c.h.b16 %v453
    %v536 = vunpack.c.l.b16 %v454
    %v537 = vunpack.c.h.b16 %v454
    %v538 = vunpack.c.l.b16 %v455
    %v539 = vunpack.c.h.b16 %v455
    %v540 = vunpack.c.l.b16 %v456
    %v541 = vunpack.c.h.b16 %v456
    %v542 = vunpack.c.l.b16 %v457
    %v543 = vunpack.c.h.b16 %v457
    %v544 = vunpack.c.l.b16 %v458
    %v545 = vunpack.c.h.b16 %v458
    %v546 = vunpack.c.l.b16 %v459
    %v547 = vunpack.c.h.b16 %v459
    %v548 = vunpack.c.l.b16 %v460
    %v549 = vunpack.c.h.b16 %v460
    %v550 = vunpack.c.l.b16 %v461
    %v551 = vunpack.c.h.b16 %v461
    %v552 = vunpack.c.l.b16 %v462
    %v553 = vunpack.c.h.b16 %v462
    %v554 = vunpack.c.l.b16 %v463
    %v555 = vunpack.c.h.b16 %v463
    %v556 = vunpack.c.l.b16 %v464
    %v557 = vunpack.c.h.b16 %v464
    %v558 = vunpack.c.l.b16 %v465
    %v559 = vunpack.c.h.b16 %v465
    %v560 = vunpack.c.l.b16 %v466
    %v561 = vunpack.c.h.b16 %v466
    %v562 = vunpack.c.l.b16 %v467
    %v563 = vunpack.c.h.b16 %v467
    %v564 = vunpack.c.l.b16 %v468
    %v565 = vunpack.c.h.b16 %v468
    %v566 = vunpack.c.l.b16 %v469
    %v567 = vunpack.c.h.b16 %v469
    %v568 = vunpack.c.l.b16 %v470
    %v569 = vunpack.c.h.b16 %v470
    %v570 = vunpack.c.l.b16 %v471
    %v571 = vunpack.c.h.b16 %v471
    %v572 = vunpack.c.l.b16 %v472
    %v573 = vunpack.c.h.b16 %v472
    %v574 = vunpack.c.l.b16 %v473
    %v575 = vunpack.c.h.b16 %v473
    %v576 = vunpack.c.l.b16 %v474
    %v577 = vunpack.c.h.b16 %v474
    %v578 = vunpack.c.l.b16 %v475
    %v579 = vunpack.c.h.b16 %v475
    %v580 = vunpack.c.l.b16 %v476
    %v581 = vunpack.c.h.b16 %v476
    %v582 = vunpack.c.l.b16 %v477
    %v583 = vunpack.c.h.b16 %v477
    %v584 = vunpack.c.l.b16 %v478
    %v585 = vunpack.c.h.b16 %v478
    %v586 = vunpack.c.l.b16 %v479
    %v587 = vunpack.c.h.b16 %v479
    %v588 = vpack.c.b16 %v526, %v524
    %v589 = vpack.c.b16 %v527, %v525
    %v590 = vpack.c.b16 %v530, %v528
    %v591 = vpack.c.b16 %v531, %v529
    %v592 = vpack.c.b16 %v534, %v532
    %v593 = vpack.c.b16 %v535, %v533
    %v594 = vpack.c.b16 %v538, %v536
    %v595 = vpack.c.b16 %v539, %v537
    %v596 = vpack.c.b16 %v542, %v540
    %v597 = vpack.c.b16 %v543, %v541
    %v598 = vpack.c.b16 %v546, %v544
    %v599 = vpack.c.b16 %v547, %v545
    %v600 = vpack.c.b16 %v550, %v548
    %v601 = vpack.c.b16 %v551, %v549
    %v602 = vpack.c.b16 %v554, %v552
    %v603 = vpack.c.b16 %v555, %v553
    %v604 = vpack.c.b16 %v558, %v556
    %v605 = vpack.c.b16 %v559, %v557
    %v606 = vpack.c.b16 %v562, %v560
    %v607 = vpack.c.b16 %v563, %v561
    %v608 = vpack.c.b16 %v566, %v564
    %v609 = vpack.c.b16 %v567, %v565
    %v610 = vpack.c.b16 %v570, %v568
    %v611 = vpack.c.b16 %v571, %v569
    %v612 = vpack.c.b16 %v574, %v572
    %v613 = vpack.c.b16 %v575, %v573
    %v614 = vpack.c.b16 %v578, %v576
    %v615 = vpack.c.b16 %v579, %v577
    %v616 = vpack.c.b16 %v582, %v580
    %v617 = vpack.c.b16 %v583, %v581
    %v618 = vpack.c.b16 %v586, %v584
    %v619 = vpack.c.b16 %v587, %v585
    %652 = vmatprep.subr.bf16.mxu0 %v589
    %653 = vmatpush1.bf16.msra.mxu0 %v588
    %654 = vmatprep.subr.bf16.mxu0 %v591
    %655 = vmatpush1.bf16.msra.mxu0 %v590
    %656 = vmatprep.subr.bf16.mxu0 %v593
    %657 = vmatpush1.bf16.msra.mxu0 %v592
    %658 = vmatprep.subr.bf16.mxu0 %v595
    %659 = vmatpush1.bf16.msra.mxu0 %v594
    %660 = vmatprep.subr.bf16.mxu0 %v597
    %661 = vmatpush1.bf16.msra.mxu0 %v596
    %662 = vmatprep.subr.bf16.mxu0 %v599
    %663 = vmatpush1.bf16.msra.mxu0 %v598
    %664 = vmatprep.subr.bf16.mxu0 %v601
    %665 = vmatpush1.bf16.msra.mxu0 %v600
    %666 = vmatprep.subr.bf16.mxu0 %v603
    %667 = vmatpush1.bf16.msra.mxu0 %v602
    %668 = vmatprep.subr.bf16.mxu0 %v605
    %669 = vmatpush1.bf16.msra.mxu0 %v604
    %670 = vmatprep.subr.bf16.mxu0 %v607
    %671 = vmatpush1.bf16.msra.mxu0 %v606
    %672 = vmatprep.subr.bf16.mxu0 %v609
    %673 = vmatpush1.bf16.msra.mxu0 %v608
    %674 = vmatprep.subr.bf16.mxu0 %v611
    %675 = vmatpush1.bf16.msra.mxu0 %v610
    %676 = vmatprep.subr.bf16.mxu0 %v613
    %677 = vmatpush1.bf16.msra.mxu0 %v612
    %678 = vmatprep.subr.bf16.mxu0 %v615
    %679 = vmatpush1.bf16.msra.mxu0 %v614
    %680 = vmatprep.subr.bf16.mxu0 %v617
    %681 = vmatpush1.bf16.msra.mxu0 %v616
    %682 = vmatprep.subr.bf16.mxu0 %v619
    %683 = vmatpush1.bf16.msra.mxu0 %v618
    %684 = vmatprep.mubr.bf16.mxu0 %v447
    %685 = vmatmul.mubr.bf16.gmra.mrb[0].mxu0 %v446
    %v686 = vpop.f32.mrb[0].mxu0
    %v687 = vadd.f32 %v485, %v686
    %v688 = vpop.f32.mrb[0].mxu0
    %v689 = vadd.f32 %v489, %v688
    %v690 = vpop.f32.mrb[0].mxu0
    %v691 = vpop.f32.mrb[0].mxu0
    %692 = vdwg.mxu0
    %v693 = vmax.f32 %v687, 0.0
    %v694 = vmax.f32 %v689, 0.0
    %v695 = vpack.c.bf16 %v693, %v693
    %v696 = vpack.c.bf16 %v694, %v694
    %v697 = vld [vmem:[#allocation10] sm:$0xf]
    %v698 = vld [vmem:[#allocation10 + $0x4] sm:$0xf]
    %v699 = vld [vmem:[#allocation10 + $0x8] sm:$0xf]
    %v700 = vld [vmem:[#allocation10 + $0xc] sm:$0xf]
    %v701 = vld [vmem:[#allocation10 + $0x10] sm:$0xf]
    %v702 = vld [vmem:[#allocation10 + $0x14] sm:$0xf]
    %v703 = vld [vmem:[#allocation10 + $0x18] sm:$0xf]
    %v704 = vld [vmem:[#allocation10 + $0x1c] sm:$0xf]
    %v705 = vld [vmem:[#allocation10 + $0x20] sm:$0xf]
    %v706 = vld [vmem:[#allocation10 + $0x24] sm:$0xf]
    %v707 = vld [vmem:[#allocation10 + $0x28] sm:$0xf]
    %v708 = vld [vmem:[#allocation10 + $0x2c] sm:$0xf]
    %v709 = vld [vmem:[#allocation10 + $0x30] sm:$0xf]
    %v710 = vld [vmem:[#allocation10 + $0x34] sm:$0xf]
    %v711 = vld [vmem:[#allocation10 + $0x38] sm:$0xf]
    %v712 = vld [vmem:[#allocation10 + $0x3c] sm:$0xf]
    %v713 = vld [vmem:[#allocation10 + $0x40] sm:$0xf]
    %v714 = vld [vmem:[#allocation10 + $0x44] sm:$0xf]
    %v715 = vld [vmem:[#allocation10 + $0x48] sm:$0xf]
    %v716 = vld [vmem:[#allocation10 + $0x4c] sm:$0xf]
    %v717 = vld [vmem:[#allocation10 + $0x50] sm:$0xf]
    %v718 = vld [vmem:[#allocation10 + $0x54] sm:$0xf]
    %v719 = vld [vmem:[#allocation10 + $0x58] sm:$0xf]
    %v720 = vld [vmem:[#allocation10 + $0x5c] sm:$0xf]
    %v721 = vld [vmem:[#allocation10 + $0x60] sm:$0xf]
    %v722 = vld [vmem:[#allocation10 + $0x64] sm:$0xf]
    %v723 = vld [vmem:[#allocation10 + $0x68] sm:$0xf]
    %v724 = vld [vmem:[#allocation10 + $0x6c] sm:$0xf]
    %v725 = vld [vmem:[#allocation10 + $0x70] sm:$0xf]
    %v726 = vld [vmem:[#allocation10 + $0x74] sm:$0xf]
    %v727 = vld [vmem:[#allocation10 + $0x78] sm:$0xf]
    %v728 = vld [vmem:[#allocation10 + $0x7c] sm:$0xf]
    %v729 = vld [vmem:[%s8] sm:$0x1]
    %v731 = vlaneseq
    %v732 = vshrl.u32 %v731, 7
    %v733 = vsub.s32 0, %v732
    %v734 = vrot.slane %v729, %v733
    %v768 = vunpack.c.l.b16 %v697
    %v769 = vunpack.c.l.b16 %v698
    %v770 = vunpack.c.l.b16 %v699
    %v771 = vunpack.c.l.b16 %v700
    %v772 = vunpack.c.l.b16 %v701
    %v773 = vunpack.c.l.b16 %v702
    %v774 = vunpack.c.l.b16 %v703
    %v775 = vunpack.c.l.b16 %v704
    %v776 = vunpack.c.l.b16 %v705
    %v777 = vunpack.c.l.b16 %v706
    %v778 = vunpack.c.l.b16 %v707
    %v779 = vunpack.c.l.b16 %v708
    %v780 = vunpack.c.l.b16 %v709
    %v781 = vunpack.c.l.b16 %v710
    %v782 = vunpack.c.l.b16 %v711
    %v783 = vunpack.c.l.b16 %v712
    %v784 = vunpack.c.l.b16 %v713
    %v785 = vunpack.c.l.b16 %v714
    %v786 = vunpack.c.l.b16 %v715
    %v787 = vunpack.c.l.b16 %v716
    %v788 = vunpack.c.l.b16 %v717
    %v789 = vunpack.c.l.b16 %v718
    %v790 = vunpack.c.l.b16 %v719
    %v791 = vunpack.c.l.b16 %v720
    %v792 = vunpack.c.l.b16 %v721
    %v793 = vunpack.c.l.b16 %v722
    %v794 = vunpack.c.l.b16 %v723
    %v795 = vunpack.c.l.b16 %v724
    %v796 = vunpack.c.l.b16 %v725
    %v797 = vunpack.c.l.b16 %v726
    %v798 = vunpack.c.l.b16 %v727
    %v799 = vunpack.c.l.b16 %v728
    %v800 = vpack.c.b16 %v769, %v768
    %v801 = vpack.c.b16 %v771, %v770
    %v802 = vpack.c.b16 %v773, %v772
    %v803 = vpack.c.b16 %v775, %v774
    %v804 = vpack.c.b16 %v777, %v776
    %v805 = vpack.c.b16 %v779, %v778
    %v806 = vpack.c.b16 %v781, %v780
    %v807 = vpack.c.b16 %v783, %v782
    %v808 = vpack.c.b16 %v785, %v784
    %v809 = vpack.c.b16 %v787, %v786
    %v810 = vpack.c.b16 %v789, %v788
    %v811 = vpack.c.b16 %v791, %v790
    %v812 = vpack.c.b16 %v793, %v792
    %v813 = vpack.c.b16 %v795, %v794
    %v814 = vpack.c.b16 %v797, %v796
    %v815 = vpack.c.b16 %v799, %v798
    %832 = vmatprep.subr.bf16.mxu0 0
    %833 = vmatpush1.bf16.msra.mxu0 %v800
    %834 = vmatprep.subr.bf16.mxu0 0
    %835 = vmatpush1.bf16.msra.mxu0 %v801
    %836 = vmatprep.subr.bf16.mxu0 0
    %837 = vmatpush1.bf16.msra.mxu0 %v802
    %838 = vmatprep.subr.bf16.mxu0 0
    %839 = vmatpush1.bf16.msra.mxu0 %v803
    %840 = vmatprep.subr.bf16.mxu0 0
    %841 = vmatpush1.bf16.msra.mxu0 %v804
    %842 = vmatprep.subr.bf16.mxu0 0
    %843 = vmatpush1.bf16.msra.mxu0 %v805
    %844 = vmatprep.subr.bf16.mxu0 0
    %845 = vmatpush1.bf16.msra.mxu0 %v806
    %846 = vmatprep.subr.bf16.mxu0 0
    %847 = vmatpush1.bf16.msra.mxu0 %v807
    %848 = vmatprep.subr.bf16.mxu0 0
    %849 = vmatpush1.bf16.msra.mxu0 %v808
    %850 = vmatprep.subr.bf16.mxu0 0
    %851 = vmatpush1.bf16.msra.mxu0 %v809
    %852 = vmatprep.subr.bf16.mxu0 0
    %853 = vmatpush1.bf16.msra.mxu0 %v810
    %854 = vmatprep.subr.bf16.mxu0 0
    %855 = vmatpush1.bf16.msra.mxu0 %v811
    %856 = vmatprep.subr.bf16.mxu0 0
    %857 = vmatpush1.bf16.msra.mxu0 %v812
    %858 = vmatprep.subr.bf16.mxu0 0
    %859 = vmatpush1.bf16.msra.mxu0 %v813
    %860 = vmatprep.subr.bf16.mxu0 0
    %861 = vmatpush1.bf16.msra.mxu0 %v814
    %862 = vmatprep.subr.bf16.mxu0 0
    %863 = vmatpush1.bf16.msra.mxu0 %v815
    %864 = vmatprep.mubr.bf16.mxu0 %v696
    %865 = vmatmul.mubr.bf16.gmra.mrb[0].mxu0 %v695
    %v866 = vpop.f32.mrb[0].mxu0
    %v867 = vadd.f32 %v734, %v866
    %v868 = vpop.f32.mrb[0].mxu0
    %v869 = vpop.f32.mrb[0].mxu0
    %v870 = vpop.f32.mrb[0].mxu0
    %871 = vdwg.mxu0
    %v872 = vtanh.pop %v867
    %v873 = vpack.c.bf16 %v872, %v872
    %874 = vst [vmem:[#allocation11] sm:$0xf] %v873
    // Predicated region
    $region58: #{tpu_custom_call.1} parent=1 // pred_check
      _
    $region59: #{tpu_custom_call.1} parent=1 // pred_check_branch
      %876 = sbr.rel (0) target = $region61
    $region60: #{tpu_custom_call.1} parent=1 // pred_region
      %s878 = ssub.s32 64, 64
      %879 = vsyncadd [#allocation4], %s878
      %s881 = sshll.u32 [#allocation11], 4
      %s882 = int_to_ptr.vmem [resolvable:$true] %s881
      %884 = dma.vmem_to_hbm [thread:$0]  %s882, 64, %s9, [#allocation4]
    $region61: #{tpu_custom_call.1} parent=1 // pred_fallthru
      _
    // Predicated region
    $region62: #{tpu_custom_call.1} parent=1 // pred_check
      _
    $region63: #{tpu_custom_call.1} parent=1 // pred_check_branch
      %886 = sbr.rel (0) target = $region65
    $region64: #{tpu_custom_call.1} parent=1 // pred_region
      %887 = dma.done [#allocation4], 64
    $region65: #{tpu_custom_call.1} parent=1 // pred_fallthru
      _
    %888 = vsyncpa [#allocation3], 1
    %889 = vsyncpa [#allocation6], 1
    %890 = vsyncpa [#allocation9], 1
    %891 = vsyncpa [#allocation4], 1

</llo_original>
